<compile_context>
chip_gen: v7x
topology: tpu7x:2x2x1
jax: 0.10.0
libtpu: 0.0.40
codegen_flags: <defaults>
</compile_context>

<pallas_src>
import functools

import jax
import jax.numpy as jnp
from jax.experimental import pallas as pl
from jax.experimental.pallas import tpu as pltpu

HIDDEN = 32  # self.hidden_units in the PyTorch module


def _mlp_kernel(x_ref, w1_ref, b1_ref, w2_ref, b2_ref, o_ref, *, epilogue_dtype):
    """One folded batch tile: out = relu(x @ W1_bd + b1) @ W2_bd + b2.

    Each row of x carries `fold` original batch rows packed along the lane dim;
    W1_bd / W2_bd are the matching block-diagonal weights, so every vreg lane
    carries real data and the output store is lane-dense.
    """
    # x arrives in its HBM dtype (f32); cast in-kernel (no extra HBM round trip).
    x = x_ref[...].astype(jnp.bfloat16)
    # Layer 1 (block-diag Linear): bf16 operands, f32 accumulation on the MXU.
    h = jnp.dot(x, w1_ref[...], preferred_element_type=jnp.float32)
    # Bias + ReLU epilogue: bf16 on v6e/v7x (bf16 VPU), f32 on v5e.
    h = jnp.maximum(h.astype(epilogue_dtype) + b1_ref[...], 0)
    # Layer 2 (block-diag Linear): bf16 in, f32 accumulate, f32 bias, f32 store.
    y = jnp.dot(h.astype(jnp.bfloat16), w2_ref[...],
                preferred_element_type=jnp.float32)
    o_ref[...] = (y + b2_ref[...]).astype(o_ref.dtype)


def _chip_flags():
    kind = jax.devices()[0].device_kind.lower()
    is_v7 = ("v7" in kind) or ("tpu7" in kind)
    bf16_vpu = is_v7 or ("v6" in kind)   # v6e / v7x have a bf16 VPU; v5e does not
    return is_v7, bf16_vpu


def _round_up(a, m):
    return ((a + m - 1) // m) * m


def neuralnet_forward(x, w1, b1, w2, b2, *, fold=None, block_rows=None):
    """Fused forward pass: relu(x @ W1 + b1) @ W2 + b2.

    x: (N, in_size) float32 -> (N, out_size) float32.
    Weights are (in_features, out_features); biases are (1, out_features).
    """
    n, in_size = x.shape
    out_size = w2.shape[1]
    is_v7, bf16_vpu = _chip_flags()

    if fold is None:
        # fold*out_size == 128 on v6e/v7x -> fully lane-dense output store;
        # smaller fold on v5e (128-wide MXU, f32 epilogue).
        fold = 32 if bf16_vpu else 16
    if block_rows is None:
        # Large tiles amortize the ~0.35 us/step grid overhead; after the fold
        # a 32K-row tile is only a few MiB of VMEM.
        block_rows = 32768 if bf16_vpu else 16384

    epilogue_dtype = jnp.bfloat16 if bf16_vpu else jnp.float32

    # --- lane-dense fold: pack `fold` batch rows along the lane dimension ----
    n_pad = _round_up(n, fold)
    if n_pad != n:
        x = jnp.pad(x, ((0, n_pad - n), (0, 0)))
    nf = n_pad // fold
    x_f = x.reshape(nf, fold * in_size)        # row-major reshape: layout no-op

    # Block-diagonal weights / tiled biases (tiny; built once per call, stay
    # resident in VMEM via constant block index).  kron in f32 (exact), then
    # round to bf16 for the MXU.
    eye = jnp.eye(fold, dtype=jnp.float32)
    w1_bd = jnp.kron(eye, w1.astype(jnp.float32)).astype(jnp.bfloat16)
    w2_bd = jnp.kron(eye, w2.astype(jnp.float32)).astype(jnp.bfloat16)
    b1_bd = jnp.tile(b1.reshape(1, HIDDEN).astype(epilogue_dtype), (1, fold))
    b2_bd = jnp.tile(b2.reshape(1, out_size).astype(jnp.float32), (1, fold))

    # --- batch tile, in folded rows ------------------------------------------
    blk_f = max(1, block_rows // fold)
    tnf = min(blk_f, nf)
    if tnf < nf:
        tnf = max(8, (tnf // 8) * 8)           # sublane-aligned tiles
        tnf = min(tnf, nf)
    if is_v7 and nf >= 16:
        # v7x has 2 TensorCores: make sure the "parallel" axis has >= 2 steps.
        cap = _round_up(pl.cdiv(nf, 2), 8)
        tnf = min(tnf, cap)

    grid = (pl.cdiv(nf, tnf),)
    kernel = functools.partial(_mlp_kernel, epilogue_dtype=epilogue_dtype)

    y_f = pl.pallas_call(
        kernel,
        out_shape=jax.ShapeDtypeStruct((nf, fold * out_size), jnp.float32),
        grid=grid,
        in_specs=[
            # x (folded): tiled over the batch; pipeline double-buffers the DMA.
            pl.BlockSpec((tnf, fold * in_size), lambda i: (i, 0)),
            # Weights / biases: constant block index -> fetched once, resident.
            pl.BlockSpec((fold * in_size, fold * HIDDEN), lambda i: (0, 0)),
            pl.BlockSpec((1, fold * HIDDEN), lambda i: (0, 0)),
            pl.BlockSpec((fold * HIDDEN, fold * out_size), lambda i: (0, 0)),
            pl.BlockSpec((1, fold * out_size), lambda i: (0, 0)),
        ],
        out_specs=pl.BlockSpec((tnf, fold * out_size), lambda i: (i, 0)),
        compiler_params=pltpu.CompilerParams(
            dimension_semantics=("parallel",),   # rows independent -> megacore
            vmem_limit_bytes=(32 << 20) if is_v7 else (64 << 20),
        ),
    )(x_f, w1_bd, b1_bd, w2_bd, b2_bd)

    # Un-fold (row-major reshape) and drop padded rows.
    return y_f.reshape(n_pad, out_size)[:n]


def init_params(key, in_size, out_size):
    """Deterministic init mimicking nn.Linear default (uniform +-1/sqrt(fan_in))."""
    k1, k2, k3, k4 = jax.random.split(key, 4)
    bound1 = 1.0 / jnp.sqrt(in_size)
    bound2 = 1.0 / jnp.sqrt(HIDDEN)
    w1 = jax.random.uniform(k1, (in_size, HIDDEN), jnp.float32, -bound1, bound1)
    b1 = jax.random.uniform(k2, (1, HIDDEN), jnp.float32, -bound1, bound1)
    w2 = jax.random.uniform(k3, (HIDDEN, out_size), jnp.float32, -bound2, bound2)
    b2 = jax.random.uniform(k4, (1, out_size), jnp.float32, -bound2, bound2)
    return w1, b1, w2, b2


if __name__ == "__main__":
    key = jax.random.PRNGKey(0)
    kx, kp = jax.random.split(key)

    # N=500 exercises the fold padding path; block_rows=256 keeps the demo grid
    # at >= 2 steps on every generation so the tiled/parallel path is exercised.
    N, IN_SIZE, OUT_SIZE = 500, 16, 4
    x = jax.random.normal(kx, (N, IN_SIZE), jnp.float32)
    w1, b1, w2, b2 = init_params(kp, IN_SIZE, OUT_SIZE)

    y = neuralnet_forward(x, w1, b1, w2, b2, block_rows=256)
    y = jax.block_until_ready(y)
    assert y.shape == (N, OUT_SIZE)

    # Pure-JAX reference mimicking the kernel's bf16 roundings.
    _, bf16_vpu = _chip_flags()
    ep = jnp.bfloat16 if bf16_vpu else jnp.float32
    xq = x.astype(jnp.bfloat16)
    w1q = w1.astype(jnp.bfloat16)
    w2q = w2.astype(jnp.bfloat16)
    h_ref = jnp.dot(xq, w1q, preferred_element_type=jnp.float32)
    h_ref = jnp.maximum(h_ref.astype(ep) + b1.astype(ep), 0)
    ref = jnp.dot(h_ref.astype(jnp.bfloat16), w2q,
                  preferred_element_type=jnp.float32) + b2
    err = float(jnp.max(jnp.abs(y - ref.astype(jnp.float32))))
    assert err < 2e-2, err

    # TODO(synk): `step()` (SGD w/ weight decay + backward) is training glue,
    # not part of the forward pass, and is intentionally not kernelized.
    print("KERNEL_OK")
</pallas_src>

<mosaic_0001>
module attributes {stable_mosaic.version = 11 : i64} {
  func.func @_mlp_kernel(%arg0: i32, %arg1: memref<16x256xf32, #tpu.memory_space<vmem>>, %arg2: memref<256x512xbf16, #tpu.memory_space<vmem>>, %arg3: memref<1x512xf32, #tpu.memory_space<vmem>>, %arg4: memref<512x64xbf16, #tpu.memory_space<vmem>>, %arg5: memref<1x64xf32, #tpu.memory_space<vmem>>, %arg6: memref<16x64xf32, #tpu.memory_space<vmem>>) attributes {dimension_semantics = [#tpu.dimension_semantics<parallel>], iteration_bounds = array<i64: 2>, scalar_prefetch = 0 : i64, scratch_operands = 0 : i64, tpu.core_type = #tpu.core_type<tc>, window_params = [{transform_indices = @transform_0, window_bounds = array<i64: 16, 256>}, {pipeline_mode = #tpu.pipeline_mode<synchronous>, transform_indices = @transform_1, window_bounds = array<i64: 256, 512>}, {pipeline_mode = #tpu.pipeline_mode<synchronous>, transform_indices = @transform_2, window_bounds = array<i64: 1, 512>}, {pipeline_mode = #tpu.pipeline_mode<synchronous>, transform_indices = @transform_3, window_bounds = array<i64: 512, 64>}, {pipeline_mode = #tpu.pipeline_mode<synchronous>, transform_indices = @transform_4, window_bounds = array<i64: 1, 64>}, {transform_indices = @transform_5, window_bounds = array<i64: 16, 64>}]} {
    %c0 = arith.constant 0 : index
    %c0_0 = arith.constant 0 : index
    %0 = vector.load %arg1[%c0, %c0_0] : memref<16x256xf32, #tpu.memory_space<vmem>>, vector<16x256xf32>
    %1 = arith.truncf %0 : vector<16x256xf32> to vector<16x256xbf16>
    %c0_1 = arith.constant 0 : index
    %c0_2 = arith.constant 0 : index
    %2 = vector.load %arg2[%c0_1, %c0_2] : memref<256x512xbf16, #tpu.memory_space<vmem>>, vector<256x512xbf16>
    %cst = arith.constant dense<0.000000e+00> : vector<16x512xf32>
    %3 = tpu.matmul %1, %2, %cst {dimension_numbers = #tpu.dot_dimension_numbers<[1], [0], [0], [1], [0, 0, 1, 1], [], []>} : vector<16x256xbf16>, vector<256x512xbf16>, vector<16x512xf32> -> vector<16x512xf32>
    %c0_3 = arith.constant 0 : index
    %c0_4 = arith.constant 0 : index
    %4 = vector.load %arg3[%c0_3, %c0_4] : memref<1x512xf32, #tpu.memory_space<vmem>>, vector<1x512xf32>
    %5 = vector.broadcast %4 : vector<1x512xf32> to vector<16x512xf32>
    %6 = arith.addf %3, %5 : vector<16x512xf32>
    %cst_5 = arith.constant 0.000000e+00 : f32
    %7 = vector.broadcast %cst_5 : f32 to vector<16x512xf32>
    %8 = arith.maximumf %6, %7 : vector<16x512xf32>
    %9 = arith.truncf %8 : vector<16x512xf32> to vector<16x512xbf16>
    %c0_6 = arith.constant 0 : index
    %c0_7 = arith.constant 0 : index
    %10 = vector.load %arg4[%c0_6, %c0_7] : memref<512x64xbf16, #tpu.memory_space<vmem>>, vector<512x64xbf16>
    %cst_8 = arith.constant dense<0.000000e+00> : vector<16x64xf32>
    %11 = tpu.matmul %9, %10, %cst_8 {dimension_numbers = #tpu.dot_dimension_numbers<[1], [0], [0], [1], [0, 0, 1, 1], [], []>} : vector<16x512xbf16>, vector<512x64xbf16>, vector<16x64xf32> -> vector<16x64xf32>
    %c0_9 = arith.constant 0 : index
    %c0_10 = arith.constant 0 : index
    %12 = vector.load %arg5[%c0_9, %c0_10] : memref<1x64xf32, #tpu.memory_space<vmem>>, vector<1x64xf32>
    %13 = vector.broadcast %12 : vector<1x64xf32> to vector<16x64xf32>
    %14 = arith.addf %11, %13 : vector<16x64xf32>
    %c0_11 = arith.constant 0 : index
    %c0_12 = arith.constant 0 : index
    %15 = vector.load %arg6[%c0_11, %c0_12] : memref<16x64xf32, #tpu.memory_space<vmem>>, vector<16x64xf32>
    tpu.vector_store %arg6[%c0_11, %c0_12], %14 {strides = array<i32>} : memref<16x64xf32, #tpu.memory_space<vmem>>, vector<16x64xf32>,
    return
  }
  func.func @transform_0(%arg0: i32) -> (i32, i32) {
    %c0_i32 = arith.constant 0 : i32
    %c0_i32_0 = arith.constant 0 : i32
    return %arg0, %c0_i32 : i32, i32
  }
  func.func @transform_1(%arg0: i32) -> (i32, i32) {
    %c0_i32 = arith.constant 0 : i32
    %c0_i32_0 = arith.constant 0 : i32
    %c0_i32_1 = arith.constant 0 : i32
    return %c0_i32, %c0_i32_0 : i32, i32
  }
  func.func @transform_2(%arg0: i32) -> (i32, i32) {
    %c0_i32 = arith.constant 0 : i32
    %c0_i32_0 = arith.constant 0 : i32
    %c0_i32_1 = arith.constant 0 : i32
    return %c0_i32, %c0_i32_0 : i32, i32
  }
  func.func @transform_3(%arg0: i32) -> (i32, i32) {
    %c0_i32 = arith.constant 0 : i32
    %c0_i32_0 = arith.constant 0 : i32
    %c0_i32_1 = arith.constant 0 : i32
    return %c0_i32, %c0_i32_0 : i32, i32
  }
  func.func @transform_4(%arg0: i32) -> (i32, i32) {
    %c0_i32 = arith.constant 0 : i32
    %c0_i32_0 = arith.constant 0 : i32
    %c0_i32_1 = arith.constant 0 : i32
    return %c0_i32, %c0_i32_0 : i32, i32
  }
  func.func @transform_5(%arg0: i32) -> (i32, i32) {
    %c0_i32 = arith.constant 0 : i32
    %c0_i32_0 = arith.constant 0 : i32
    return %arg0, %c0_i32 : i32, i32
  }
}

</mosaic_0001>

<llo_original>
// kernel: tpu_custom_call.1
$region0: #{tpu_custom_call.1}
  #allocation0 [shape = 'u32[]', space=smem, size = 0x4, offset = 0x4, fixed_abs, tag = 'smem constant byte address 0x4 - core index']
  #allocation1 [shape = 'u32[144,128]{1,0:T(1,128)}', space=vmem, size = 0x12000, scoped, tag = 'internal scratch']
  %s0 = inlined_call_operand.hbm [shape: f32[32,256], index: 0, kind: input, shape index: {}]
  %s1 = inlined_call_operand.hbm [shape: bf16[256,512], index: 1, kind: input, shape index: {}]
  %s2 = inlined_call_operand.hbm [shape: f32[1,512], index: 2, kind: input, shape index: {}]
  %s3 = inlined_call_operand.hbm [shape: bf16[512,64], index: 3, kind: input, shape index: {}]
  %s4 = inlined_call_operand.hbm [shape: f32[1,64], index: 4, kind: input, shape index: {}]
  %s5 = inlined_call_operand.hbm [shape: f32[32,64], index: 5, kind: output, shape index: {}]
  %s6 = sld [smem:[#allocation0]]
  $region73: #{tpu_custom_call.1} parent=0
    _
  %s8 = ssub.s32 1, %s6
  %s9 = scalar_select 0, %s8, %s6
  $region1: #{tpu_custom_call.1} parent=0
    #allocation2 [shape = 'u8[32768]{0}', space=vmem, size = 0x8000, scoped, tag = 'input window, operand 0']
    #allocation3 [shape = 's32[2]{0}', space=sflag, size = 0x8, scoped, tag = 'scoped memory for tpu_custom_call.1']
    #allocation4 [shape = 's32[2]{0}', space=sflag, size = 0x8, scoped, tag = 'scoped memory for tpu_custom_call.1']
    #allocation5 [shape = 'u8[262144]{0}', space=vmem, size = 0x40000, scoped, tag = 'input window, operand 1, single buffered']
    #allocation6 [shape = 's32[1]{0}', space=sflag, size = 0x4, scoped, tag = 'scoped memory for tpu_custom_call.1']
    #allocation7 [shape = 'u8[2048]{0}', space=vmem, size = 0x800, scoped, tag = 'input window, operand 2, single buffered']
    #allocation8 [shape = 'u8[131072]{0}', space=vmem, size = 0x20000, scoped, tag = 'input window, operand 3, single buffered']
    #allocation9 [shape = 's32[1]{0}', space=sflag, size = 0x4, scoped, tag = 'scoped memory for tpu_custom_call.1']
    #allocation10 [shape = 'u8[512]{0}', space=vmem, size = 0x400, scoped, tag = 'input window, operand 4, single buffered']
    #allocation11 [shape = 'u8[16384]{0}', space=vmem, size = 0x4000, scoped, tag = 'output window, operand 0']
    %10 = vsyncpa [#allocation3], 0
    %s11 = scalar_lea.sflag [#allocation3], 1
    %12 = vsyncpa %s11, 0
    %13 = vsyncpa [#allocation6], 0
    %14 = vsyncpa [#allocation9], 0
    %15 = vsyncpa [#allocation4], 0
    %s16 = scalar_lea.sflag [#allocation4], 1
    %17 = vsyncpa %s16, 0
    loop: start=0, step=1, limit=4
    $region2: #{tpu_custom_call.1} parent=1 // loop_pre_header
      _
    $region3: #{tpu_custom_call.1} parent=1 // loop_header
      %s19 = sphi 0, %s23
      %p20 = scmp.ge.s32.totalorder %s19, 4
      %s29 = sphi 0, %s31
      %s32 = sphi 0, %s29
      %s33 = sphi 0, %s32
      %s49 = sphi 0, %s33
      %s53 = sphi 0, %s53
      %s55 = sphi 0, %s53
      %s56 = sphi 0, %s55
      %s70 = sphi 0, %s56
      %s74 = sphi 0, %s74
      %s76 = sphi 0, %s74
      %s77 = sphi 0, %s76
      %s91 = sphi 0, %s77
      %s95 = sphi 0, %s95
      %s97 = sphi 0, %s95
      %s98 = sphi 0, %s97
      %s112 = sphi 0, %s98
      %s116 = sphi 0, %s116
      %s118 = sphi 0, %s116
      %s119 = sphi 0, %s118
      %s133 = sphi 0, %s119
      %s139 = sphi 0, %s141
      %s142 = sphi 0, %s139
      %s143 = sphi 0, %s142
      %s159 = sphi 0, %s143
    $region4: #{tpu_custom_call.1} parent=1 // loop_header_branch
      %22 = sbr.rel (%p20) target = $region8
    $region5: #{tpu_custom_call.1} parent=1 // loop_body
      %s24 = ssub.s32 %s19, 1
      %s25 = ssub.s32 %s19, 2
      %s26 = sadd.s32 %s19, 1
      %s27 = ssub.s32 %s19, %s26
      %p28 = scmp.eq.s32.totalorder %s27, 0
      %s30 = sadd.s32 %s29, 1
      %s31 = scalar_select %p28, %s29, %s30
      %p34 = pneg %p28
      %p35 = scmp.eq.s32.totalorder %s19, 1
      %p36 = por %p34, %p35
      %p37 = scmp.ne.s32.totalorder %s29, %s32
      %p38 = scmp.eq.s32.totalorder %s19, 0
      %p39 = por %p37, %p38
      %p40 = scmp.ne.s32.totalorder %s29, %s32
      %p41 = scmp.eq.s32.totalorder %s24, 1
      %p42 = por %p40, %p41
      %p43 = scmp.ne.s32.totalorder %s32, %s33
      %p44 = scmp.eq.s32.totalorder %s24, 0
      %p45 = por %p43, %p44
      %p46 = scmp.ne.s32.totalorder %s32, %s33
      %p47 = scmp.eq.s32.totalorder %s25, 1
      %p48 = por %p46, %p47
      %p50 = scmp.ne.s32.totalorder %s33, %s49
      %p51 = scmp.eq.s32.totalorder %s25, 0
      %p52 = por %p50, %p51
      %s54 = sadd.s32 %s53, 1
      %p57 = scmp.eq.s32.totalorder %s19, 1
      %p58 = scmp.ne.s32.totalorder %s53, %s55
      %p59 = scmp.eq.s32.totalorder %s19, 0
      %p60 = por %p58, %p59
      %p61 = scmp.ne.s32.totalorder %s53, %s55
      %p62 = scmp.eq.s32.totalorder %s24, 1
      %p63 = por %p61, %p62
      %p64 = scmp.ne.s32.totalorder %s55, %s56
      %p65 = scmp.eq.s32.totalorder %s24, 0
      %p66 = por %p64, %p65
      %p67 = scmp.ne.s32.totalorder %s55, %s56
      %p68 = scmp.eq.s32.totalorder %s25, 1
      %p69 = por %p67, %p68
      %p71 = scmp.ne.s32.totalorder %s56, %s70
      %p72 = scmp.eq.s32.totalorder %s25, 0
      %p73 = por %p71, %p72
      %s75 = sadd.s32 %s74, 1
      %p78 = scmp.eq.s32.totalorder %s19, 1
      %p79 = scmp.ne.s32.totalorder %s74, %s76
      %p80 = scmp.eq.s32.totalorder %s19, 0
      %p81 = por %p79, %p80
      %p82 = scmp.ne.s32.totalorder %s74, %s76
      %p83 = scmp.eq.s32.totalorder %s24, 1
      %p84 = por %p82, %p83
      %p85 = scmp.ne.s32.totalorder %s76, %s77
      %p86 = scmp.eq.s32.totalorder %s24, 0
      %p87 = por %p85, %p86
      %p88 = scmp.ne.s32.totalorder %s76, %s77
      %p89 = scmp.eq.s32.totalorder %s25, 1
      %p90 = por %p88, %p89
      %p92 = scmp.ne.s32.totalorder %s77, %s91
      %p93 = scmp.eq.s32.totalorder %s25, 0
      %p94 = por %p92, %p93
      %s96 = sadd.s32 %s95, 1
      %p99 = scmp.eq.s32.totalorder %s19, 1
      %p100 = scmp.ne.s32.totalorder %s95, %s97
      %p101 = scmp.eq.s32.totalorder %s19, 0
      %p102 = por %p100, %p101
      %p103 = scmp.ne.s32.totalorder %s95, %s97
      %p104 = scmp.eq.s32.totalorder %s24, 1
      %p105 = por %p103, %p104
      %p106 = scmp.ne.s32.totalorder %s97, %s98
      %p107 = scmp.eq.s32.totalorder %s24, 0
      %p108 = por %p106, %p107
      %p109 = scmp.ne.s32.totalorder %s97, %s98
      %p110 = scmp.eq.s32.totalorder %s25, 1
      %p111 = por %p109, %p110
      %p113 = scmp.ne.s32.totalorder %s98, %s112
      %p114 = scmp.eq.s32.totalorder %s25, 0
      %p115 = por %p113, %p114
      %s117 = sadd.s32 %s116, 1
      %p120 = scmp.eq.s32.totalorder %s19, 1
      %p121 = scmp.ne.s32.totalorder %s116, %s118
      %p122 = scmp.eq.s32.totalorder %s19, 0
      %p123 = por %p121, %p122
      %p124 = scmp.ne.s32.totalorder %s116, %s118
      %p125 = scmp.eq.s32.totalorder %s24, 1
      %p126 = por %p124, %p125
      %p127 = scmp.ne.s32.totalorder %s118, %s119
      %p128 = scmp.eq.s32.totalorder %s24, 0
      %p129 = por %p127, %p128
      %p130 = scmp.ne.s32.totalorder %s118, %s119
      %p131 = scmp.eq.s32.totalorder %s25, 1
      %p132 = por %p130, %p131
      %p134 = scmp.ne.s32.totalorder %s119, %s133
      %p135 = scmp.eq.s32.totalorder %s25, 0
      %p136 = por %p134, %p135
      %s137 = ssub.s32 %s19, %s26
      %p138 = scmp.eq.s32.totalorder %s137, 0
      %s140 = sadd.s32 %s139, 1
      %s141 = scalar_select %p138, %s139, %s140
      %p144 = pneg %p138
      %p145 = scmp.eq.s32.totalorder %s19, 1
      %p146 = por %p144, %p145
      %p147 = scmp.ne.s32.totalorder %s139, %s142
      %p148 = scmp.eq.s32.totalorder %s19, 0
      %p149 = por %p147, %p148
      %p150 = scmp.ne.s32.totalorder %s139, %s142
      %p151 = scmp.eq.s32.totalorder %s24, 1
      %p152 = por %p150, %p151
      %p153 = scmp.ne.s32.totalorder %s142, %s143
      %p154 = scmp.eq.s32.totalorder %s24, 0
      %p155 = por %p153, %p154
      %p156 = scmp.ne.s32.totalorder %s142, %s143
      %p157 = scmp.eq.s32.totalorder %s25, 1
      %p158 = por %p156, %p157
      %p160 = scmp.ne.s32.totalorder %s143, %s159
      %p161 = scmp.eq.s32.totalorder %s25, 0
      %p162 = por %p160, %p161
      %p163 = scmp.le.s32.totalorder 1, %s19
      %p164 = scmp.lt.s32.totalorder %s19, 3
      %p165 = pnand %p163, %p164
      %p166 = pneg %p165
      // Predicated region
      $region9: #{tpu_custom_call.1} parent=5 // pred_check
        _
      $region10: #{tpu_custom_call.1} parent=5 // pred_check_branch
        %168 = sbr.rel (%p165) target = $region12
      $region11: #{tpu_custom_call.1} parent=5 // pred_region
        %s169 = ssub.s32 %s19, 1
        // Predicated region
        $region13: #{tpu_custom_call.1} parent=11 // pred_check
          %p170 = pneg %p66
        $region14: #{tpu_custom_call.1} parent=11 // pred_check_branch
          %172 = sbr.rel (%p170) target = $region16
        $region15: #{tpu_custom_call.1} parent=11 // pred_region
          %s174 = ssub.s32 8192, 8192
          %175 = vsyncadd [#allocation6], %s174
          %s176 = sshll.u32 [#allocation5], 4
          %s177 = int_to_ptr.vmem [resolvable:$true] %s176
          %182 = dma.hbm_to_vmem [thread:$0]  %s1, 8192, %s177, [#allocation6], 256, 256, 16
        $region16: #{tpu_custom_call.1} parent=11 // pred_fallthru
          _
        // Predicated region
        $region17: #{tpu_custom_call.1} parent=11 // pred_check
          %p183 = pneg %p87
        $region18: #{tpu_custom_call.1} parent=11 // pred_check_branch
          %185 = sbr.rel (%p183) target = $region20
        $region19: #{tpu_custom_call.1} parent=11 // pred_region
          %s187 = ssub.s32 64, 64
          %188 = vsyncadd [#allocation6], %s187
          %s190 = sshll.u32 [#allocation7], 4
          %s191 = int_to_ptr.vmem [resolvable:$true] %s190
          %193 = dma.hbm_to_vmem [thread:$0]  %s2, 64, %s191, [#allocation6]
        $region20: #{tpu_custom_call.1} parent=11 // pred_fallthru
          _
        // Predicated region
        $region21: #{tpu_custom_call.1} parent=11 // pred_check
          %p194 = pneg %p108
        $region22: #{tpu_custom_call.1} parent=11 // pred_check_branch
          %196 = sbr.rel (%p194) target = $region24
        $region23: #{tpu_custom_call.1} parent=11 // pred_region
          %s198 = ssub.s32 4096, 4096
          %199 = vsyncadd [#allocation9], %s198
          %s200 = sshll.u32 [#allocation8], 4
          %s201 = int_to_ptr.vmem [resolvable:$true] %s200
          %206 = dma.hbm_to_vmem [thread:$0]  %s3, 4096, %s201, [#allocation9], 64, 64, 4
        $region24: #{tpu_custom_call.1} parent=11 // pred_fallthru
          _
        // Predicated region
        $region25: #{tpu_custom_call.1} parent=11 // pred_check
          %p207 = pneg %p129
        $region26: #{tpu_custom_call.1} parent=11 // pred_check_branch
          %209 = sbr.rel (%p207) target = $region28
        $region27: #{tpu_custom_call.1} parent=11 // pred_region
          %s211 = ssub.s32 16, 16
          %212 = vsyncadd [#allocation9], %s211
          %s214 = sshll.u32 [#allocation10], 4
          %s215 = int_to_ptr.vmem [resolvable:$true] %s214
          %217 = dma.hbm_to_vmem [thread:$0]  %s4, 16, %s215, [#allocation9]
        $region28: #{tpu_custom_call.1} parent=11 // pred_fallthru
          _
      $region12: #{tpu_custom_call.1} parent=5 // pred_fallthru
        _
      %p218 = scmp.lt.s32.totalorder %s19, 2
      // Predicated region
      $region29: #{tpu_custom_call.1} parent=5 // pred_check
        %p219 = pneg %p218
      $region30: #{tpu_custom_call.1} parent=5 // pred_check_branch
        %221 = sbr.rel (%p219) target = $region32
      $region31: #{tpu_custom_call.1} parent=5 // pred_region
        // Predicated region
        $region33: #{tpu_custom_call.1} parent=31 // pred_check
          %p222 = pneg %p39
        $region34: #{tpu_custom_call.1} parent=31 // pred_check_branch
          %224 = sbr.rel (%p222) target = $region36
        $region35: #{tpu_custom_call.1} parent=31 // pred_region
          %s225 = sand.u32 %s29, 1
          %s226 = scalar_lea.sflag [#allocation3], %s225
          %s227 = sand.u32 %s29, 1
          %s228 = smul.addr %s227, 32
          %s229 = scalar_lea.vmem [#allocation2], %s228
          %s230 = smul.u32 2, %s19
          %s232 = ssub.s32 512, 512
          %233 = vsyncadd %s226, %s232
          %s234 = smul.addr %s230, 2
          %s235 = smul.addr %s234, 128
          %s236 = scalar_lea.hbm %s0, %s235
          %s237 = sshll.u32 %s229, 4
          %s238 = int_to_ptr.vmem [resolvable:$true] %s237
          %243 = dma.hbm_to_vmem [thread:$0]  %s236, 512, %s238, %s226, 256, 256, 16
        $region36: #{tpu_custom_call.1} parent=31 // pred_fallthru
          _
      $region32: #{tpu_custom_call.1} parent=5 // pred_fallthru
        _
      %p244 = scmp.le.s32.totalorder 1, %s19
      %p245 = scmp.lt.s32.totalorder %s19, 3
      %p246 = pnand %p244, %p245
      %p247 = pneg %p246
      // Predicated region
      $region37: #{tpu_custom_call.1} parent=5 // pred_check
        _
      $region38: #{tpu_custom_call.1} parent=5 // pred_check_branch
        %249 = sbr.rel (%p246) target = $region40
      $region39: #{tpu_custom_call.1} parent=5 // pred_region
        %s250 = ssub.s32 %s19, 1
        %s251 = sand.u32 %s32, 1
        %s252 = scalar_lea.sflag [#allocation3], %s251
        %s253 = sand.u32 %s32, 1
        %s254 = smul.addr %s253, 32
        %s255 = scalar_lea.vmem [#allocation2], %s254
        // Predicated region
        $region41: #{tpu_custom_call.1} parent=39 // pred_check
          %p256 = pneg %p45
        $region42: #{tpu_custom_call.1} parent=39 // pred_check_branch
          %258 = sbr.rel (%p256) target = $region44
        $region43: #{tpu_custom_call.1} parent=39 // pred_region
          %259 = dma.done %s252, 512
        $region44: #{tpu_custom_call.1} parent=39 // pred_fallthru
          _
        // Predicated region
        $region45: #{tpu_custom_call.1} parent=39 // pred_check
          %p260 = pneg %p66
        $region46: #{tpu_custom_call.1} parent=39 // pred_check_branch
          %262 = sbr.rel (%p260) target = $region48
        $region47: #{tpu_custom_call.1} parent=39 // pred_region
          %263 = dma.done [#allocation6], 8192
        $region48: #{tpu_custom_call.1} parent=39 // pred_fallthru
          _
        // Predicated region
        $region49: #{tpu_custom_call.1} parent=39 // pred_check
          %p264 = pneg %p87
        $region50: #{tpu_custom_call.1} parent=39 // pred_check_branch
          %266 = sbr.rel (%p264) target = $region52
        $region51: #{tpu_custom_call.1} parent=39 // pred_region
          %267 = dma.done [#allocation6], 64
        $region52: #{tpu_custom_call.1} parent=39 // pred_fallthru
          _
        // Predicated region
        $region53: #{tpu_custom_call.1} parent=39 // pred_check
          %p268 = pneg %p108
        $region54: #{tpu_custom_call.1} parent=39 // pred_check_branch
          %270 = sbr.rel (%p268) target = $region56
        $region55: #{tpu_custom_call.1} parent=39 // pred_region
          %271 = dma.done [#allocation9], 4096
        $region56: #{tpu_custom_call.1} parent=39 // pred_fallthru
          _
        // Predicated region
        $region57: #{tpu_custom_call.1} parent=39 // pred_check
          %p272 = pneg %p129
        $region58: #{tpu_custom_call.1} parent=39 // pred_check_branch
          %274 = sbr.rel (%p272) target = $region60
        $region59: #{tpu_custom_call.1} parent=39 // pred_region
          %275 = dma.done [#allocation9], 16
        $region60: #{tpu_custom_call.1} parent=39 // pred_fallthru
          _
        %s276 = sand.u32 %s32, 1
        %s277 = scalar_lea.sflag [#allocation3], %s276
        %s278 = sand.u32 %s32, 1
        %s279 = smul.addr %s278, 32
        %s280 = scalar_lea.vmem [#allocation2], %s279
        %p281 = pneg %p45
        %p282 = pneg %p42
        %p283 = pneg %p66
        %p284 = pneg %p63
        %p285 = pneg %p87
        %p286 = pneg %p84
        %p287 = pneg %p108
        %p288 = pneg %p105
        %p289 = pneg %p129
        %p290 = pneg %p126
        %p291 = pneg %p155
        %p292 = pneg %p152
        %s293 = sand.u32 %s142, 1
        %s294 = scalar_lea.sflag [#allocation4], %s293
        %s295 = sand.u32 %s142, 1
        %s296 = smul.addr %s295, 16
        %s297 = scalar_lea.vmem [#allocation11], %s296
        %s298 = smul.u32 2, %s24
        %s299 = smul.u32 2, %s24
        %v301 = vld [vmem:[%s255] sm:$0xff]
        %v302 = vld [vmem:[%s255 + $0x8] sm:$0xff]
        %v303 = vld [vmem:[%s255 + $0x10] sm:$0xff]
        %v304 = vld [vmem:[%s255 + $0x18] sm:$0xff]
        %v305 = vpack.c.bf16 %v303, %v301
        %v306 = vpack.c.bf16 %v304, %v302
        %v307 = vld [vmem:[#allocation5] sm:$0xff]
        %v308 = vld [vmem:[#allocation5 + $0x8] sm:$0xff]
        %v309 = vld [vmem:[#allocation5 + $0x10] sm:$0xff]
        %v310 = vld [vmem:[#allocation5 + $0x18] sm:$0xff]
        %v311 = vld [vmem:[#allocation5 + $0x20] sm:$0xff]
        %v312 = vld [vmem:[#allocation5 + $0x28] sm:$0xff]
        %v313 = vld [vmem:[#allocation5 + $0x30] sm:$0xff]
        %v314 = vld [vmem:[#allocation5 + $0x38] sm:$0xff]
        %v315 = vld [vmem:[#allocation5 + $0x40] sm:$0xff]
        %v316 = vld [vmem:[#allocation5 + $0x48] sm:$0xff]
        %v317 = vld [vmem:[#allocation5 + $0x50] sm:$0xff]
        %v318 = vld [vmem:[#allocation5 + $0x58] sm:$0xff]
        %v319 = vld [vmem:[#allocation5 + $0x60] sm:$0xff]
        %v320 = vld [vmem:[#allocation5 + $0x68] sm:$0xff]
        %v321 = vld [vmem:[#allocation5 + $0x70] sm:$0xff]
        %v322 = vld [vmem:[#allocation5 + $0x78] sm:$0xff]
        %v323 = vld [vmem:[#allocation5 + $0x80] sm:$0xff]
        %v324 = vld [vmem:[#allocation5 + $0x88] sm:$0xff]
        %v325 = vld [vmem:[#allocation5 + $0x90] sm:$0xff]
        %v326 = vld [vmem:[#allocation5 + $0x98] sm:$0xff]
        %v327 = vld [vmem:[#allocation5 + $0xa0] sm:$0xff]
        %v328 = vld [vmem:[#allocation5 + $0xa8] sm:$0xff]
        %v329 = vld [vmem:[#allocation5 + $0xb0] sm:$0xff]
        %v330 = vld [vmem:[#allocation5 + $0xb8] sm:$0xff]
        %v331 = vld [vmem:[#allocation5 + $0xc0] sm:$0xff]
        %v332 = vld [vmem:[#allocation5 + $0xc8] sm:$0xff]
        %v333 = vld [vmem:[#allocation5 + $0xd0] sm:$0xff]
        %v334 = vld [vmem:[#allocation5 + $0xd8] sm:$0xff]
        %v335 = vld [vmem:[#allocation5 + $0xe0] sm:$0xff]
        %v336 = vld [vmem:[#allocation5 + $0xe8] sm:$0xff]
        %v337 = vld [vmem:[#allocation5 + $0xf0] sm:$0xff]
        %v338 = vld [vmem:[#allocation5 + $0xf8] sm:$0xff]
        %v339 = vld [vmem:[#allocation5 + $0x100] sm:$0xff]
        %v340 = vld [vmem:[#allocation5 + $0x108] sm:$0xff]
        %v341 = vld [vmem:[#allocation5 + $0x110] sm:$0xff]
        %v342 = vld [vmem:[#allocation5 + $0x118] sm:$0xff]
        %v343 = vld [vmem:[#allocation5 + $0x120] sm:$0xff]
        %v344 = vld [vmem:[#allocation5 + $0x128] sm:$0xff]
        %v345 = vld [vmem:[#allocation5 + $0x130] sm:$0xff]
        %v346 = vld [vmem:[#allocation5 + $0x138] sm:$0xff]
        %v347 = vld [vmem:[#allocation5 + $0x140] sm:$0xff]
        %v348 = vld [vmem:[#allocation5 + $0x148] sm:$0xff]
        %v349 = vld [vmem:[#allocation5 + $0x150] sm:$0xff]
        %v350 = vld [vmem:[#allocation5 + $0x158] sm:$0xff]
        %v351 = vld [vmem:[#allocation5 + $0x160] sm:$0xff]
        %v352 = vld [vmem:[#allocation5 + $0x168] sm:$0xff]
        %v353 = vld [vmem:[#allocation5 + $0x170] sm:$0xff]
        %v354 = vld [vmem:[#allocation5 + $0x178] sm:$0xff]
        %v355 = vld [vmem:[#allocation5 + $0x180] sm:$0xff]
        %v356 = vld [vmem:[#allocation5 + $0x188] sm:$0xff]
        %v357 = vld [vmem:[#allocation5 + $0x190] sm:$0xff]
        %v358 = vld [vmem:[#allocation5 + $0x198] sm:$0xff]
        %v359 = vld [vmem:[#allocation5 + $0x1a0] sm:$0xff]
        %v360 = vld [vmem:[#allocation5 + $0x1a8] sm:$0xff]
        %v361 = vld [vmem:[#allocation5 + $0x1b0] sm:$0xff]
        %v362 = vld [vmem:[#allocation5 + $0x1b8] sm:$0xff]
        %v363 = vld [vmem:[#allocation5 + $0x1c0] sm:$0xff]
        %v364 = vld [vmem:[#allocation5 + $0x1c8] sm:$0xff]
        %v365 = vld [vmem:[#allocation5 + $0x1d0] sm:$0xff]
        %v366 = vld [vmem:[#allocation5 + $0x1d8] sm:$0xff]
        %v367 = vld [vmem:[#allocation5 + $0x1e0] sm:$0xff]
        %v368 = vld [vmem:[#allocation5 + $0x1e8] sm:$0xff]
        %v369 = vld [vmem:[#allocation5 + $0x1f0] sm:$0xff]
        %v370 = vld [vmem:[#allocation5 + $0x1f8] sm:$0xff]
        %v371 = vld [vmem:[#allocation7] sm:$0xf]
        %v373 = vlaneseq
        %v374 = vshrl.u32 %v373, 7
        %v375 = vsub.s32 0, %v374
        %v376 = vrot.slane %v371, %v375
        %v377 = vlaneseq
        %v378 = vshrl.u32 %v377, 7
        %v379 = vsub.s32 1, %v378
        %v380 = vrot.slane %v371, %v379
        %v381 = vlaneseq
        %v382 = vshrl.u32 %v381, 7
        %v383 = vsub.s32 2, %v382
        %v384 = vrot.slane %v371, %v383
        %v385 = vlaneseq
        %v386 = vshrl.u32 %v385, 7
        %v387 = vsub.s32 3, %v386
        %v388 = vrot.slane %v371, %v387
        %v457 = vunpack.c.l.b16 %v307
        %v458 = vunpack.c.h.b16 %v307
        %v459 = vunpack.c.l.b16 %v308
        %v460 = vunpack.c.h.b16 %v308
        %v461 = vunpack.c.l.b16 %v309
        %v462 = vunpack.c.h.b16 %v309
        %v463 = vunpack.c.l.b16 %v310
        %v464 = vunpack.c.h.b16 %v310
        %v465 = vunpack.c.l.b16 %v311
        %v466 = vunpack.c.h.b16 %v311
        %v467 = vunpack.c.l.b16 %v312
        %v468 = vunpack.c.h.b16 %v312
        %v469 = vunpack.c.l.b16 %v313
        %v470 = vunpack.c.h.b16 %v313
        %v471 = vunpack.c.l.b16 %v314
        %v472 = vunpack.c.h.b16 %v314
        %v473 = vunpack.c.l.b16 %v315
        %v474 = vunpack.c.h.b16 %v315
        %v475 = vunpack.c.l.b16 %v316
        %v476 = vunpack.c.h.b16 %v316
        %v477 = vunpack.c.l.b16 %v317
        %v478 = vunpack.c.h.b16 %v317
        %v479 = vunpack.c.l.b16 %v318
        %v480 = vunpack.c.h.b16 %v318
        %v481 = vunpack.c.l.b16 %v319
        %v482 = vunpack.c.h.b16 %v319
        %v483 = vunpack.c.l.b16 %v320
        %v484 = vunpack.c.h.b16 %v320
        %v485 = vunpack.c.l.b16 %v321
        %v486 = vunpack.c.h.b16 %v321
        %v487 = vunpack.c.l.b16 %v322
        %v488 = vunpack.c.h.b16 %v322
        %v489 = vunpack.c.l.b16 %v323
        %v490 = vunpack.c.h.b16 %v323
        %v491 = vunpack.c.l.b16 %v324
        %v492 = vunpack.c.h.b16 %v324
        %v493 = vunpack.c.l.b16 %v325
        %v494 = vunpack.c.h.b16 %v325
        %v495 = vunpack.c.l.b16 %v326
        %v496 = vunpack.c.h.b16 %v326
        %v497 = vunpack.c.l.b16 %v327
        %v498 = vunpack.c.h.b16 %v327
        %v499 = vunpack.c.l.b16 %v328
        %v500 = vunpack.c.h.b16 %v328
        %v501 = vunpack.c.l.b16 %v329
        %v502 = vunpack.c.h.b16 %v329
        %v503 = vunpack.c.l.b16 %v330
        %v504 = vunpack.c.h.b16 %v330
        %v505 = vunpack.c.l.b16 %v331
        %v506 = vunpack.c.h.b16 %v331
        %v507 = vunpack.c.l.b16 %v332
        %v508 = vunpack.c.h.b16 %v332
        %v509 = vunpack.c.l.b16 %v333
        %v510 = vunpack.c.h.b16 %v333
        %v511 = vunpack.c.l.b16 %v334
        %v512 = vunpack.c.h.b16 %v334
        %v513 = vunpack.c.l.b16 %v335
        %v514 = vunpack.c.h.b16 %v335
        %v515 = vunpack.c.l.b16 %v336
        %v516 = vunpack.c.h.b16 %v336
        %v517 = vunpack.c.l.b16 %v337
        %v518 = vunpack.c.h.b16 %v337
        %v519 = vunpack.c.l.b16 %v338
        %v520 = vunpack.c.h.b16 %v338
        %v521 = vunpack.c.l.b16 %v339
        %v522 = vunpack.c.h.b16 %v339
        %v523 = vunpack.c.l.b16 %v340
        %v524 = vunpack.c.h.b16 %v340
        %v525 = vunpack.c.l.b16 %v341
        %v526 = vunpack.c.h.b16 %v341
        %v527 = vunpack.c.l.b16 %v342
        %v528 = vunpack.c.h.b16 %v342
        %v529 = vunpack.c.l.b16 %v343
        %v530 = vunpack.c.h.b16 %v343
        %v531 = vunpack.c.l.b16 %v344
        %v532 = vunpack.c.h.b16 %v344
        %v533 = vunpack.c.l.b16 %v345
        %v534 = vunpack.c.h.b16 %v345
        %v535 = vunpack.c.l.b16 %v346
        %v536 = vunpack.c.h.b16 %v346
        %v537 = vunpack.c.l.b16 %v347
        %v538 = vunpack.c.h.b16 %v347
        %v539 = vunpack.c.l.b16 %v348
        %v540 = vunpack.c.h.b16 %v348
        %v541 = vunpack.c.l.b16 %v349
        %v542 = vunpack.c.h.b16 %v349
        %v543 = vunpack.c.l.b16 %v350
        %v544 = vunpack.c.h.b16 %v350
        %v545 = vunpack.c.l.b16 %v351
        %v546 = vunpack.c.h.b16 %v351
        %v547 = vunpack.c.l.b16 %v352
        %v548 = vunpack.c.h.b16 %v352
        %v549 = vunpack.c.l.b16 %v353
        %v550 = vunpack.c.h.b16 %v353
        %v551 = vunpack.c.l.b16 %v354
        %v552 = vunpack.c.h.b16 %v354
        %v553 = vunpack.c.l.b16 %v355
        %v554 = vunpack.c.h.b16 %v355
        %v555 = vunpack.c.l.b16 %v356
        %v556 = vunpack.c.h.b16 %v356
        %v557 = vunpack.c.l.b16 %v357
        %v558 = vunpack.c.h.b16 %v357
        %v559 = vunpack.c.l.b16 %v358
        %v560 = vunpack.c.h.b16 %v358
        %v561 = vunpack.c.l.b16 %v359
        %v562 = vunpack.c.h.b16 %v359
        %v563 = vunpack.c.l.b16 %v360
        %v564 = vunpack.c.h.b16 %v360
        %v565 = vunpack.c.l.b16 %v361
        %v566 = vunpack.c.h.b16 %v361
        %v567 = vunpack.c.l.b16 %v362
        %v568 = vunpack.c.h.b16 %v362
        %v569 = vunpack.c.l.b16 %v363
        %v570 = vunpack.c.h.b16 %v363
        %v571 = vunpack.c.l.b16 %v364
        %v572 = vunpack.c.h.b16 %v364
        %v573 = vunpack.c.l.b16 %v365
        %v574 = vunpack.c.h.b16 %v365
        %v575 = vunpack.c.l.b16 %v366
        %v576 = vunpack.c.h.b16 %v366
        %v577 = vunpack.c.l.b16 %v367
        %v578 = vunpack.c.h.b16 %v367
        %v579 = vunpack.c.l.b16 %v368
        %v580 = vunpack.c.h.b16 %v368
        %v581 = vunpack.c.l.b16 %v369
        %v582 = vunpack.c.h.b16 %v369
        %v583 = vunpack.c.l.b16 %v370
        %v584 = vunpack.c.h.b16 %v370
        %v585 = vpack.c.b16 %v461, %v457
        %v586 = vpack.c.b16 %v462, %v458
        %v587 = vpack.c.b16 %v463, %v459
        %v588 = vpack.c.b16 %v464, %v460
        %v589 = vpack.c.b16 %v469, %v465
        %v590 = vpack.c.b16 %v470, %v466
        %v591 = vpack.c.b16 %v471, %v467
        %v592 = vpack.c.b16 %v472, %v468
        %v593 = vpack.c.b16 %v477, %v473
        %v594 = vpack.c.b16 %v478, %v474
        %v595 = vpack.c.b16 %v479, %v475
        %v596 = vpack.c.b16 %v480, %v476
        %v597 = vpack.c.b16 %v485, %v481
        %v598 = vpack.c.b16 %v486, %v482
        %v599 = vpack.c.b16 %v487, %v483
        %v600 = vpack.c.b16 %v488, %v484
        %v601 = vpack.c.b16 %v493, %v489
        %v602 = vpack.c.b16 %v494, %v490
        %v603 = vpack.c.b16 %v495, %v491
        %v604 = vpack.c.b16 %v496, %v492
        %v605 = vpack.c.b16 %v501, %v497
        %v606 = vpack.c.b16 %v502, %v498
        %v607 = vpack.c.b16 %v503, %v499
        %v608 = vpack.c.b16 %v504, %v500
        %v609 = vpack.c.b16 %v509, %v505
        %v610 = vpack.c.b16 %v510, %v506
        %v611 = vpack.c.b16 %v511, %v507
        %v612 = vpack.c.b16 %v512, %v508
        %v613 = vpack.c.b16 %v517, %v513
        %v614 = vpack.c.b16 %v518, %v514
        %v615 = vpack.c.b16 %v519, %v515
        %v616 = vpack.c.b16 %v520, %v516
        %v617 = vpack.c.b16 %v525, %v521
        %v618 = vpack.c.b16 %v526, %v522
        %v619 = vpack.c.b16 %v527, %v523
        %v620 = vpack.c.b16 %v528, %v524
        %v621 = vpack.c.b16 %v533, %v529
        %v622 = vpack.c.b16 %v534, %v530
        %v623 = vpack.c.b16 %v535, %v531
        %v624 = vpack.c.b16 %v536, %v532
        %v625 = vpack.c.b16 %v541, %v537
        %v626 = vpack.c.b16 %v542, %v538
        %v627 = vpack.c.b16 %v543, %v539
        %v628 = vpack.c.b16 %v544, %v540
        %v629 = vpack.c.b16 %v549, %v545
        %v630 = vpack.c.b16 %v550, %v546
        %v631 = vpack.c.b16 %v551, %v547
        %v632 = vpack.c.b16 %v552, %v548
        %v633 = vpack.c.b16 %v557, %v553
        %v634 = vpack.c.b16 %v558, %v554
        %v635 = vpack.c.b16 %v559, %v555
        %v636 = vpack.c.b16 %v560, %v556
        %v637 = vpack.c.b16 %v565, %v561
        %v638 = vpack.c.b16 %v566, %v562
        %v639 = vpack.c.b16 %v567, %v563
        %v640 = vpack.c.b16 %v568, %v564
        %v641 = vpack.c.b16 %v573, %v569
        %v642 = vpack.c.b16 %v574, %v570
        %v643 = vpack.c.b16 %v575, %v571
        %v644 = vpack.c.b16 %v576, %v572
        %v645 = vpack.c.b16 %v581, %v577
        %v646 = vpack.c.b16 %v582, %v578
        %v647 = vpack.c.b16 %v583, %v579
        %v648 = vpack.c.b16 %v584, %v580
        %713 = vmatprep.subr.bf16.mxu0 %v586
        %714 = vmatpush1.bf16.msra.mxu0 %v585
        %715 = vmatprep.subr.bf16.mxu0 %v590
        %716 = vmatpush1.bf16.msra.mxu0 %v589
        %717 = vmatprep.subr.bf16.mxu0 %v594
        %718 = vmatpush1.bf16.msra.mxu0 %v593
        %719 = vmatprep.subr.bf16.mxu0 %v598
        %720 = vmatpush1.bf16.msra.mxu0 %v597
        %721 = vmatprep.subr.bf16.mxu0 %v602
        %722 = vmatpush1.bf16.msra.mxu0 %v601
        %723 = vmatprep.subr.bf16.mxu0 %v606
        %724 = vmatpush1.bf16.msra.mxu0 %v605
        %725 = vmatprep.subr.bf16.mxu0 %v610
        %726 = vmatpush1.bf16.msra.mxu0 %v609
        %727 = vmatprep.subr.bf16.mxu0 %v614
        %728 = vmatpush1.bf16.msra.mxu0 %v613
        %729 = vmatprep.subr.bf16.mxu0 %v618
        %730 = vmatpush1.bf16.msra.mxu0 %v617
        %731 = vmatprep.subr.bf16.mxu0 %v622
        %732 = vmatpush1.bf16.msra.mxu0 %v621
        %733 = vmatprep.subr.bf16.mxu0 %v626
        %734 = vmatpush1.bf16.msra.mxu0 %v625
        %735 = vmatprep.subr.bf16.mxu0 %v630
        %736 = vmatpush1.bf16.msra.mxu0 %v629
        %737 = vmatprep.subr.bf16.mxu0 %v634
        %738 = vmatpush1.bf16.msra.mxu0 %v633
        %739 = vmatprep.subr.bf16.mxu0 %v638
        %740 = vmatpush1.bf16.msra.mxu0 %v637
        %741 = vmatprep.subr.bf16.mxu0 %v642
        %742 = vmatpush1.bf16.msra.mxu0 %v641
        %743 = vmatprep.subr.bf16.mxu0 %v646
        %744 = vmatpush1.bf16.msra.mxu0 %v645
        %745 = vmatprep.mubr.bf16.mxu0 %v306
        %746 = vmatmul.mubr.bf16.gmra.mrb[0].mxu0 %v305
        %v747 = vpop.f32.mrb[0].mxu0
        %v748 = vadd.f32 %v376, %v747
        %v749 = vpop.f32.mrb[0].mxu0
        %v750 = vadd.f32 %v380, %v749
        %v751 = vpop.f32.mrb[0].mxu0
        %v752 = vadd.f32 %v376, %v751
        %v753 = vpop.f32.mrb[0].mxu0
        %v754 = vadd.f32 %v380, %v753
        %755 = vdwg.mxu0
        %756 = vmatprep.subr.bf16.mxu0 %v588
        %757 = vmatpush1.bf16.msra.mxu0 %v587
        %758 = vmatprep.subr.bf16.mxu0 %v592
        %759 = vmatpush1.bf16.msra.mxu0 %v591
        %760 = vmatprep.subr.bf16.mxu0 %v596
        %761 = vmatpush1.bf16.msra.mxu0 %v595
        %762 = vmatprep.subr.bf16.mxu0 %v600
        %763 = vmatpush1.bf16.msra.mxu0 %v599
        %764 = vmatprep.subr.bf16.mxu0 %v604
        %765 = vmatpush1.bf16.msra.mxu0 %v603
        %766 = vmatprep.subr.bf16.mxu0 %v608
        %767 = vmatpush1.bf16.msra.mxu0 %v607
        %768 = vmatprep.subr.bf16.mxu0 %v612
        %769 = vmatpush1.bf16.msra.mxu0 %v611
        %770 = vmatprep.subr.bf16.mxu0 %v616
        %771 = vmatpush1.bf16.msra.mxu0 %v615
        %772 = vmatprep.subr.bf16.mxu0 %v620
        %773 = vmatpush1.bf16.msra.mxu0 %v619
        %774 = vmatprep.subr.bf16.mxu0 %v624
        %775 = vmatpush1.bf16.msra.mxu0 %v623
        %776 = vmatprep.subr.bf16.mxu0 %v628
        %777 = vmatpush1.bf16.msra.mxu0 %v627
        %778 = vmatprep.subr.bf16.mxu0 %v632
        %779 = vmatpush1.bf16.msra.mxu0 %v631
        %780 = vmatprep.subr.bf16.mxu0 %v636
        %781 = vmatpush1.bf16.msra.mxu0 %v635
        %782 = vmatprep.subr.bf16.mxu0 %v640
        %783 = vmatpush1.bf16.msra.mxu0 %v639
        %784 = vmatprep.subr.bf16.mxu0 %v644
        %785 = vmatpush1.bf16.msra.mxu0 %v643
        %786 = vmatprep.subr.bf16.mxu0 %v648
        %787 = vmatpush1.bf16.msra.mxu0 %v647
        %788 = vmatprep.mubr.bf16.mxu0 %v306
        %789 = vmatmul.mubr.bf16.gmra.mrb[0].mxu0 %v305
        %v790 = vpop.f32.mrb[0].mxu0
        %v791 = vadd.f32 %v384, %v790
        %v792 = vpop.f32.mrb[0].mxu0
        %v793 = vadd.f32 %v388, %v792
        %v794 = vpop.f32.mrb[0].mxu0
        %v795 = vadd.f32 %v384, %v794
        %v796 = vpop.f32.mrb[0].mxu0
        %v797 = vadd.f32 %v388, %v796
        %798 = vdwg.mxu0
        %v799 = vmax.f32 %v748, 0.0
        %v800 = vmax.f32 %v750, 0.0
        %v801 = vmax.f32 %v791, 0.0
        %v802 = vmax.f32 %v793, 0.0
        %v803 = vmax.f32 %v752, 0.0
        %v804 = vmax.f32 %v754, 0.0
        %v805 = vmax.f32 %v795, 0.0
        %v806 = vmax.f32 %v797, 0.0
        %v807 = vpack.c.bf16 %v803, %v799
        %v808 = vpack.c.bf16 %v804, %v800
        %v809 = vpack.c.bf16 %v805, %v801
        %v810 = vpack.c.bf16 %v806, %v802
        %v811 = vld [vmem:[#allocation8] sm:$0xf]
        %v812 = vld [vmem:[#allocation8 + $0x4] sm:$0xf]
        %v813 = vld [vmem:[#allocation8 + $0x8] sm:$0xf]
        %v814 = vld [vmem:[#allocation8 + $0xc] sm:$0xf]
        %v815 = vld [vmem:[#allocation8 + $0x10] sm:$0xf]
        %v816 = vld [vmem:[#allocation8 + $0x14] sm:$0xf]
        %v817 = vld [vmem:[#allocation8 + $0x18] sm:$0xf]
        %v818 = vld [vmem:[#allocation8 + $0x1c] sm:$0xf]
        %v819 = vld [vmem:[#allocation8 + $0x20] sm:$0xf]
        %v820 = vld [vmem:[#allocation8 + $0x24] sm:$0xf]
        %v821 = vld [vmem:[#allocation8 + $0x28] sm:$0xf]
        %v822 = vld [vmem:[#allocation8 + $0x2c] sm:$0xf]
        %v823 = vld [vmem:[#allocation8 + $0x30] sm:$0xf]
        %v824 = vld [vmem:[#allocation8 + $0x34] sm:$0xf]
        %v825 = vld [vmem:[#allocation8 + $0x38] sm:$0xf]
        %v826 = vld [vmem:[#allocation8 + $0x3c] sm:$0xf]
        %v827 = vld [vmem:[#allocation8 + $0x40] sm:$0xf]
        %v828 = vld [vmem:[#allocation8 + $0x44] sm:$0xf]
        %v829 = vld [vmem:[#allocation8 + $0x48] sm:$0xf]
        %v830 = vld [vmem:[#allocation8 + $0x4c] sm:$0xf]
        %v831 = vld [vmem:[#allocation8 + $0x50] sm:$0xf]
        %v832 = vld [vmem:[#allocation8 + $0x54] sm:$0xf]
        %v833 = vld [vmem:[#allocation8 + $0x58] sm:$0xf]
        %v834 = vld [vmem:[#allocation8 + $0x5c] sm:$0xf]
        %v835 = vld [vmem:[#allocation8 + $0x60] sm:$0xf]
        %v836 = vld [vmem:[#allocation8 + $0x64] sm:$0xf]
        %v837 = vld [vmem:[#allocation8 + $0x68] sm:$0xf]
        %v838 = vld [vmem:[#allocation8 + $0x6c] sm:$0xf]
        %v839 = vld [vmem:[#allocation8 + $0x70] sm:$0xf]
        %v840 = vld [vmem:[#allocation8 + $0x74] sm:$0xf]
        %v841 = vld [vmem:[#allocation8 + $0x78] sm:$0xf]
        %v842 = vld [vmem:[#allocation8 + $0x7c] sm:$0xf]
        %v843 = vld [vmem:[#allocation8 + $0x80] sm:$0xf]
        %v844 = vld [vmem:[#allocation8 + $0x84] sm:$0xf]
        %v845 = vld [vmem:[#allocation8 + $0x88] sm:$0xf]
        %v846 = vld [vmem:[#allocation8 + $0x8c] sm:$0xf]
        %v847 = vld [vmem:[#allocation8 + $0x90] sm:$0xf]
        %v848 = vld [vmem:[#allocation8 + $0x94] sm:$0xf]
        %v849 = vld [vmem:[#allocation8 + $0x98] sm:$0xf]
        %v850 = vld [vmem:[#allocation8 + $0x9c] sm:$0xf]
        %v851 = vld [vmem:[#allocation8 + $0xa0] sm:$0xf]
        %v852 = vld [vmem:[#allocation8 + $0xa4] sm:$0xf]
        %v853 = vld [vmem:[#allocation8 + $0xa8] sm:$0xf]
        %v854 = vld [vmem:[#allocation8 + $0xac] sm:$0xf]
        %v855 = vld [vmem:[#allocation8 + $0xb0] sm:$0xf]
        %v856 = vld [vmem:[#allocation8 + $0xb4] sm:$0xf]
        %v857 = vld [vmem:[#allocation8 + $0xb8] sm:$0xf]
        %v858 = vld [vmem:[#allocation8 + $0xbc] sm:$0xf]
        %v859 = vld [vmem:[#allocation8 + $0xc0] sm:$0xf]
        %v860 = vld [vmem:[#allocation8 + $0xc4] sm:$0xf]
        %v861 = vld [vmem:[#allocation8 + $0xc8] sm:$0xf]
        %v862 = vld [vmem:[#allocation8 + $0xcc] sm:$0xf]
        %v863 = vld [vmem:[#allocation8 + $0xd0] sm:$0xf]
        %v864 = vld [vmem:[#allocation8 + $0xd4] sm:$0xf]
        %v865 = vld [vmem:[#allocation8 + $0xd8] sm:$0xf]
        %v866 = vld [vmem:[#allocation8 + $0xdc] sm:$0xf]
        %v867 = vld [vmem:[#allocation8 + $0xe0] sm:$0xf]
        %v868 = vld [vmem:[#allocation8 + $0xe4] sm:$0xf]
        %v869 = vld [vmem:[#allocation8 + $0xe8] sm:$0xf]
        %v870 = vld [vmem:[#allocation8 + $0xec] sm:$0xf]
        %v871 = vld [vmem:[#allocation8 + $0xf0] sm:$0xf]
        %v872 = vld [vmem:[#allocation8 + $0xf4] sm:$0xf]
        %v873 = vld [vmem:[#allocation8 + $0xf8] sm:$0xf]
        %v874 = vld [vmem:[#allocation8 + $0xfc] sm:$0xf]
        %v875 = vld [vmem:[#allocation10] sm:$0x1]
        %v877 = vlaneseq
        %v878 = vshrl.u32 %v877, 7
        %v879 = vsub.s32 0, %v878
        %v880 = vrot.slane %v875, %v879
        %v946 = vunpack.c.l.b16 %v811
        %v947 = vunpack.c.l.b16 %v812
        %v948 = vunpack.c.l.b16 %v813
        %v949 = vunpack.c.l.b16 %v814
        %v950 = vunpack.c.l.b16 %v815
        %v951 = vunpack.c.l.b16 %v816
        %v952 = vunpack.c.l.b16 %v817
        %v953 = vunpack.c.l.b16 %v818
        %v954 = vunpack.c.l.b16 %v819
        %v955 = vunpack.c.l.b16 %v820
        %v956 = vunpack.c.l.b16 %v821
        %v957 = vunpack.c.l.b16 %v822
        %v958 = vunpack.c.l.b16 %v823
        %v959 = vunpack.c.l.b16 %v824
        %v960 = vunpack.c.l.b16 %v825
        %v961 = vunpack.c.l.b16 %v826
        %v962 = vunpack.c.l.b16 %v827
        %v963 = vunpack.c.l.b16 %v828
        %v964 = vunpack.c.l.b16 %v829
        %v965 = vunpack.c.l.b16 %v830
        %v966 = vunpack.c.l.b16 %v831
        %v967 = vunpack.c.l.b16 %v832
        %v968 = vunpack.c.l.b16 %v833
        %v969 = vunpack.c.l.b16 %v834
        %v970 = vunpack.c.l.b16 %v835
        %v971 = vunpack.c.l.b16 %v836
        %v972 = vunpack.c.l.b16 %v837
        %v973 = vunpack.c.l.b16 %v838
        %v974 = vunpack.c.l.b16 %v839
        %v975 = vunpack.c.l.b16 %v840
        %v976 = vunpack.c.l.b16 %v841
        %v977 = vunpack.c.l.b16 %v842
        %v978 = vunpack.c.l.b16 %v843
        %v979 = vunpack.c.l.b16 %v844
        %v980 = vunpack.c.l.b16 %v845
        %v981 = vunpack.c.l.b16 %v846
        %v982 = vunpack.c.l.b16 %v847
        %v983 = vunpack.c.l.b16 %v848
        %v984 = vunpack.c.l.b16 %v849
        %v985 = vunpack.c.l.b16 %v850
        %v986 = vunpack.c.l.b16 %v851
        %v987 = vunpack.c.l.b16 %v852
        %v988 = vunpack.c.l.b16 %v853
        %v989 = vunpack.c.l.b16 %v854
        %v990 = vunpack.c.l.b16 %v855
        %v991 = vunpack.c.l.b16 %v856
        %v992 = vunpack.c.l.b16 %v857
        %v993 = vunpack.c.l.b16 %v858
        %v994 = vunpack.c.l.b16 %v859
        %v995 = vunpack.c.l.b16 %v860
        %v996 = vunpack.c.l.b16 %v861
        %v997 = vunpack.c.l.b16 %v862
        %v998 = vunpack.c.l.b16 %v863
        %v999 = vunpack.c.l.b16 %v864
        %v1000 = vunpack.c.l.b16 %v865
        %v1001 = vunpack.c.l.b16 %v866
        %v1002 = vunpack.c.l.b16 %v867
        %v1003 = vunpack.c.l.b16 %v868
        %v1004 = vunpack.c.l.b16 %v869
        %v1005 = vunpack.c.l.b16 %v870
        %v1006 = vunpack.c.l.b16 %v871
        %v1007 = vunpack.c.l.b16 %v872
        %v1008 = vunpack.c.l.b16 %v873
        %v1009 = vunpack.c.l.b16 %v874
        %v1010 = vpack.c.b16 %v947, %v946
        %v1011 = vpack.c.b16 %v949, %v948
        %v1012 = vpack.c.b16 %v951, %v950
        %v1013 = vpack.c.b16 %v953, %v952
        %v1014 = vpack.c.b16 %v955, %v954
        %v1015 = vpack.c.b16 %v957, %v956
        %v1016 = vpack.c.b16 %v959, %v958
        %v1017 = vpack.c.b16 %v961, %v960
        %v1018 = vpack.c.b16 %v963, %v962
        %v1019 = vpack.c.b16 %v965, %v964
        %v1020 = vpack.c.b16 %v967, %v966
        %v1021 = vpack.c.b16 %v969, %v968
        %v1022 = vpack.c.b16 %v971, %v970
        %v1023 = vpack.c.b16 %v973, %v972
        %v1024 = vpack.c.b16 %v975, %v974
        %v1025 = vpack.c.b16 %v977, %v976
        %v1026 = vpack.c.b16 %v979, %v978
        %v1027 = vpack.c.b16 %v981, %v980
        %v1028 = vpack.c.b16 %v983, %v982
        %v1029 = vpack.c.b16 %v985, %v984
        %v1030 = vpack.c.b16 %v987, %v986
        %v1031 = vpack.c.b16 %v989, %v988
        %v1032 = vpack.c.b16 %v991, %v990
        %v1033 = vpack.c.b16 %v993, %v992
        %v1034 = vpack.c.b16 %v995, %v994
        %v1035 = vpack.c.b16 %v997, %v996
        %v1036 = vpack.c.b16 %v999, %v998
        %v1037 = vpack.c.b16 %v1001, %v1000
        %v1038 = vpack.c.b16 %v1003, %v1002
        %v1039 = vpack.c.b16 %v1005, %v1004
        %v1040 = vpack.c.b16 %v1007, %v1006
        %v1041 = vpack.c.b16 %v1009, %v1008
        %1074 = vmatprep.subr.bf16.mxu0 0
        %1075 = vmatpush1.bf16.msra.mxu0 %v1010
        %1076 = vmatprep.subr.bf16.mxu0 0
        %1077 = vmatpush1.bf16.msra.mxu0 %v1011
        %1078 = vmatprep.subr.bf16.mxu0 0
        %1079 = vmatpush1.bf16.msra.mxu0 %v1012
        %1080 = vmatprep.subr.bf16.mxu0 0
        %1081 = vmatpush1.bf16.msra.mxu0 %v1013
        %1082 = vmatprep.subr.bf16.mxu0 0
        %1083 = vmatpush1.bf16.msra.mxu0 %v1014
        %1084 = vmatprep.subr.bf16.mxu0 0
        %1085 = vmatpush1.bf16.msra.mxu0 %v1015
        %1086 = vmatprep.subr.bf16.mxu0 0
        %1087 = vmatpush1.bf16.msra.mxu0 %v1016
        %1088 = vmatprep.subr.bf16.mxu0 0
        %1089 = vmatpush1.bf16.msra.mxu0 %v1017
        %1090 = vmatprep.subr.bf16.mxu0 0
        %1091 = vmatpush1.bf16.msra.mxu0 %v1018
        %1092 = vmatprep.subr.bf16.mxu0 0
        %1093 = vmatpush1.bf16.msra.mxu0 %v1019
        %1094 = vmatprep.subr.bf16.mxu0 0
        %1095 = vmatpush1.bf16.msra.mxu0 %v1020
        %1096 = vmatprep.subr.bf16.mxu0 0
        %1097 = vmatpush1.bf16.msra.mxu0 %v1021
        %1098 = vmatprep.subr.bf16.mxu0 0
        %1099 = vmatpush1.bf16.msra.mxu0 %v1022
        %1100 = vmatprep.subr.bf16.mxu0 0
        %1101 = vmatpush1.bf16.msra.mxu0 %v1023
        %1102 = vmatprep.subr.bf16.mxu0 0
        %1103 = vmatpush1.bf16.msra.mxu0 %v1024
        %1104 = vmatprep.subr.bf16.mxu0 0
        %1105 = vmatpush1.bf16.msra.mxu0 %v1025
        %1106 = vmatprep.mubr.bf16.mxu0 %v808
        %1107 = vmatmul.mubr.bf16.gmra.mrb[0].mxu0 %v807
        %v1108 = vpop.f32.mrb[0].mxu0
        %v1109 = vadd.f32 %v880, %v1108
        %v1110 = vpop.f32.mrb[0].mxu0
        %v1111 = vpop.f32.mrb[0].mxu0
        %v1112 = vadd.f32 %v880, %v1111
        %v1113 = vpop.f32.mrb[0].mxu0
        %1114 = vdwg.mxu0
        %1115 = vmatprep.subr.bf16.mxu0 0
        %1116 = vmatpush1.bf16.msra.mxu0 %v1026
        %1117 = vmatprep.subr.bf16.mxu0 0
        %1118 = vmatpush1.bf16.msra.mxu0 %v1027
        %1119 = vmatprep.subr.bf16.mxu0 0
        %1120 = vmatpush1.bf16.msra.mxu0 %v1028
        %1121 = vmatprep.subr.bf16.mxu0 0
        %1122 = vmatpush1.bf16.msra.mxu0 %v1029
        %1123 = vmatprep.subr.bf16.mxu0 0
        %1124 = vmatpush1.bf16.msra.mxu0 %v1030
        %1125 = vmatprep.subr.bf16.mxu0 0
        %1126 = vmatpush1.bf16.msra.mxu0 %v1031
        %1127 = vmatprep.subr.bf16.mxu0 0
        %1128 = vmatpush1.bf16.msra.mxu0 %v1032
        %1129 = vmatprep.subr.bf16.mxu0 0
        %1130 = vmatpush1.bf16.msra.mxu0 %v1033
        %1131 = vmatprep.subr.bf16.mxu0 0
        %1132 = vmatpush1.bf16.msra.mxu0 %v1034
        %1133 = vmatprep.subr.bf16.mxu0 0
        %1134 = vmatpush1.bf16.msra.mxu0 %v1035
        %1135 = vmatprep.subr.bf16.mxu0 0
        %1136 = vmatpush1.bf16.msra.mxu0 %v1036
        %1137 = vmatprep.subr.bf16.mxu0 0
        %1138 = vmatpush1.bf16.msra.mxu0 %v1037
        %1139 = vmatprep.subr.bf16.mxu0 0
        %1140 = vmatpush1.bf16.msra.mxu0 %v1038
        %1141 = vmatprep.subr.bf16.mxu0 0
        %1142 = vmatpush1.bf16.msra.mxu0 %v1039
        %1143 = vmatprep.subr.bf16.mxu0 0
        %1144 = vmatpush1.bf16.msra.mxu0 %v1040
        %1145 = vmatprep.subr.bf16.mxu0 0
        %1146 = vmatpush1.bf16.msra.mxu0 %v1041
        %1147 = vmatprep.mubr.bf16.mxu0 %v810
        %1148 = vmatmul.mubr.bf16.gmra.mrb[0].mxu0 %v809
        %v1149 = vpop.f32.mrb[0].mxu0
        %v1150 = vadd.f32 %v1109, %v1149
        %v1151 = vpop.f32.mrb[0].mxu0
        %v1152 = vpop.f32.mrb[0].mxu0
        %v1153 = vadd.f32 %v1112, %v1152
        %v1154 = vpop.f32.mrb[0].mxu0
        %1155 = vdwg.mxu0
        %vm1156 = vcmask 523264
        %1157 = vst.msk [vmem:[%s297] sm:$0xff] %vm1156, %v1150
        %1158 = vst.msk [vmem:[%s297 + $0x8] sm:$0xff] %vm1156, %v1153
        %s1159 = sand.u32 %s142, 1
        %s1160 = scalar_lea.sflag [#allocation4], %s1159
        %s1161 = sand.u32 %s142, 1
        %s1162 = smul.addr %s1161, 16
        %s1163 = scalar_lea.vmem [#allocation11], %s1162
        // Predicated region
        $region61: #{tpu_custom_call.1} parent=39 // pred_check
          %p1164 = pneg %p152
        $region62: #{tpu_custom_call.1} parent=39 // pred_check_branch
          %1166 = sbr.rel (%p1164) target = $region64
        $region63: #{tpu_custom_call.1} parent=39 // pred_region
          %s1167 = smul.u32 2, %s24
          %s1169 = ssub.s32 256, 256
          %1170 = vsyncadd %s1160, %s1169
          %s1171 = smul.addr %s1167, 128
          %s1172 = scalar_lea.hbm %s5, %s1171
          %s1173 = sshll.u32 %s1163, 4
          %s1174 = int_to_ptr.vmem [resolvable:$true] %s1173
          %1179 = dma.vmem_to_hbm [thread:$0]  %s1174, 256, %s1172, %s1160, 128, 128, 8
        $region64: #{tpu_custom_call.1} parent=39 // pred_fallthru
          _
      $region40: #{tpu_custom_call.1} parent=5 // pred_fallthru
        _
      %p1180 = scmp.le.s32.totalorder 2, %s19
      // Predicated region
      $region65: #{tpu_custom_call.1} parent=5 // pred_check
        %p1181 = pneg %p1180
      $region66: #{tpu_custom_call.1} parent=5 // pred_check_branch
        %1183 = sbr.rel (%p1181) target = $region68
      $region67: #{tpu_custom_call.1} parent=5 // pred_region
        %s1184 = ssub.s32 %s19, 2
        // Predicated region
        $region69: #{tpu_custom_call.1} parent=67 // pred_check
          %p1185 = pneg %p158
        $region70: #{tpu_custom_call.1} parent=67 // pred_check_branch
          %1187 = sbr.rel (%p1185) target = $region72
        $region71: #{tpu_custom_call.1} parent=67 // pred_region
          %s1188 = sand.u32 %s143, 1
          %s1189 = scalar_lea.sflag [#allocation4], %s1188
          %s1190 = sand.u32 %s143, 1
          %s1191 = smul.addr %s1190, 16
          %s1192 = scalar_lea.vmem [#allocation11], %s1191
          %1193 = dma.done %s1189, 256
        $region72: #{tpu_custom_call.1} parent=67 // pred_fallthru
          _
      $region68: #{tpu_custom_call.1} parent=5 // pred_fallthru
        _
    $region6: #{tpu_custom_call.1} parent=1 // loop_footer
      %s23 = sadd.s32 1, %s19
    $region7: #{tpu_custom_call.1} parent=1 // loop_footer_branch
      %18 = sbr.rel target = $region3
    $region8: #{tpu_custom_call.1} parent=1 // loop_exit
      _
    %1194 = vsyncpa [#allocation3], 1
    %s1195 = scalar_lea.sflag [#allocation3], 1
    %1196 = vsyncpa %s1195, 1
    %1197 = vsyncpa [#allocation6], 1
    %1198 = vsyncpa [#allocation9], 1
    %1199 = vsyncpa [#allocation4], 1
    %s1200 = scalar_lea.sflag [#allocation4], 1
    %1201 = vsyncpa %s1200, 1

</llo_original>
